<compile_context>
chip_gen: v6e
topology: v6e:2x2x1
jax: 0.10.0
libtpu: 0.0.40
codegen_flags: <defaults>
</compile_context>

<pallas_src>
import functools

import jax
import jax.numpy as jnp
from jax import lax
from jax.experimental import pallas as pl
from jax.experimental.pallas import tpu as pltpu


_LANE = 128
_UNROLL = 8                              # rows per unrolled chunk in gather loops
_VMEM_TABLE_BUDGET = 8 * 1024 * 1024     # combined augmented-table bytes for the
                                         # VMEM-resident fast path (conservative
                                         # for v7x's 64 MiB VMEM / TC, incl. the
                                         # possible input double-buffer)


def _round_up(x, m):
    return (x + m - 1) // m * m


def _emit_compute(u, i, emb_size, mean_ref, pred_ref, urow_ref, irow_ref):
    """Shared epilogue: write gathered rows + the lane-dense prediction row."""
    _, e_pad = u.shape
    # Only the real embedding columns go back to HBM (avoid padded writeback).
    urow_ref[...] = u[:, :emb_size]
    irow_ref[...] = i[:, :emb_size]
    # Row-sum of u*i equals sum(U*I) + U_b + I_b (bias columns folded in).
    # One-row MXU matmul keeps the prediction lane-dense as (1, TB).
    prod = u * i
    ones_row = jnp.ones((1, e_pad), jnp.float32)
    pred_row = lax.dot_general(
        ones_row, prod,
        dimension_numbers=(((1,), (1,)), ((), ())),
        preferred_element_type=jnp.float32)                    # (1, TB)
    pred_ref[...] = pred_row + mean_ref[0, 0]


@functools.partial(jax.jit, static_argnames=("emb_size", "force_hbm_gather"))
def mf_forward(u_id, i_id, user_table, item_table, mean, *, emb_size,
               force_hbm_gather=False):
    """Pallas equivalent of mf.forward. Returns (pred[B], U[B,E], I[B,E])."""
    B = u_id.shape[0]
    NU, E_pad = user_table.shape
    NI = item_table.shape[0]
    E = emb_size

    # Batch tiling: large tiles (up to 512 rows) amortize per-grid-step
    # overhead and keep many gather DMAs in flight.  For tiny demo batches
    # (B < 128) the pred block is lane-sparse; fine for the demo, not a
    # production batch size.
    n_tiles = -(-B // 512)
    TB = _round_up(-(-B // n_tiles), 8)
    B_pad = _round_up(B, TB)
    nb = B_pad // TB

    # Pad ids with 0 and clamp to valid rows so every gather stays in range.
    # (torch's nn.Embedding raises on out-of-range ids; here they are clamped.)
    uid = jnp.zeros((B_pad,), jnp.int32).at[:B].set(
        jnp.clip(u_id.astype(jnp.int32), 0, NU - 1))
    iid = jnp.zeros((B_pad,), jnp.int32).at[:B].set(
        jnp.clip(i_id.astype(jnp.int32), 0, NI - 1))
    mean2d = jnp.asarray(mean, jnp.float32).reshape(1, 1)

    table_bytes = (NU + NI) * E_pad * 4
    use_vmem_tables = (table_bytes <= _VMEM_TABLE_BUDGET) and not force_hbm_gather

    # ------------------------------------------------------------------ #
    # Path A: tables resident in VMEM, gather via dynamic row indexing.   #
    # ------------------------------------------------------------------ #
    def vmem_kernel(uid_ref, iid_ref,            # SMEM scalar prefetch
                    utab_ref, itab_ref,          # whole tables in VMEM
                    mean_ref,                    # (1, 1) f32, SMEM
                    pred_ref, urow_ref, irow_ref,
                    ubuf, ibuf):                 # (TB, E_pad) scratch
        base = pl.program_id(0) * TB

        @pl.loop(0, TB // _UNROLL)
        def _gather(blk):
            for j in range(_UNROLL):             # manual 8-row unroll
                r = blk * _UNROLL + j
                ubuf[r, :] = utab_ref[uid_ref[base + r], :]
                ibuf[r, :] = itab_ref[iid_ref[base + r], :]

        _emit_compute(ubuf[...], ibuf[...], E, mean_ref,
                      pred_ref, urow_ref, irow_ref)

    # ------------------------------------------------------------------ #
    # Path B: tables in HBM, per-row DMA gather with cross-grid-step      #
    # double-buffered prefetch (scratch slot = grid step parity).         #
    # ------------------------------------------------------------------ #
    def hbm_kernel(uid_ref, iid_ref,             # SMEM scalar prefetch
                   utab_ref, itab_ref,           # HBM (pl.ANY)
                   mean_ref,                     # (1, 1) f32, SMEM
                   pred_ref, urow_ref, irow_ref,
                   ubuf, ibuf, sems):            # (2, TB, E_pad) x2, DMA (2, 2)
        b = pl.program_id(0)
        nb_g = pl.num_programs(0)
        slot = b % 2

        def issue_tile(tile, slot_idx):
            base_t = tile * TB

            @pl.loop(0, TB // _UNROLL)
            def _issue(blk):
                for j in range(_UNROLL):         # manual 8-row unroll
                    r = blk * _UNROLL + j
                    pltpu.make_async_copy(
                        utab_ref.at[uid_ref[base_t + r]],
                        ubuf.at[slot_idx, r], sems.at[slot_idx, 0]).start()
                    pltpu.make_async_copy(
                        itab_ref.at[iid_ref[base_t + r]],
                        ibuf.at[slot_idx, r], sems.at[slot_idx, 1]).start()

        # Prime the pipeline: the first grid step gathers its own tile.
        @pl.when(b == 0)
        def _():
            issue_tile(0, 0)

        # Prefetch the NEXT tile into the other slot BEFORE waiting on the
        # current one, so its DMA latency hides behind this step's compute
        # and the pipeline's output writeback.  (Requires sequential step
        # order -> this path uses "arbitrary" dimension semantics.)
        @pl.when(b + 1 < nb_g)
        def _():
            issue_tile(b + 1, 1 - slot)

        # Wait for the current tile.  All row copies of a (slot, table) pair
        # share one DMA semaphore (4 total); per-row waits keep the semaphore
        # accounting exact and are non-blocking once the prefetch has landed.
        base = b * TB

        @pl.loop(0, TB // _UNROLL)
        def _wait(blk):
            for j in range(_UNROLL):
                r = blk * _UNROLL + j
                pltpu.make_async_copy(
                    utab_ref.at[uid_ref[base + r]],
                    ubuf.at[slot, r], sems.at[slot, 0]).wait()
                pltpu.make_async_copy(
                    itab_ref.at[iid_ref[base + r]],
                    ibuf.at[slot, r], sems.at[slot, 1]).wait()

        _emit_compute(ubuf[slot], ibuf[slot], E, mean_ref,
                      pred_ref, urow_ref, irow_ref)

    # ------------------------------------------------------------------ #

    out_shape = (
        jax.ShapeDtypeStruct((1, B_pad), jnp.float32),      # pred (lane-dense)
        jax.ShapeDtypeStruct((B_pad, E), jnp.float32),      # gathered user rows
        jax.ShapeDtypeStruct((B_pad, E), jnp.float32),      # gathered item rows
    )
    out_specs = (
        pl.BlockSpec((1, TB), lambda b, uid, iid: (0, b)),
        pl.BlockSpec((TB, E), lambda b, uid, iid: (b, 0)),
        pl.BlockSpec((TB, E), lambda b, uid, iid: (b, 0)),
    )

    if use_vmem_tables:
        kernel = vmem_kernel
        in_specs = [
            pl.BlockSpec((NU, E_pad), lambda b, uid, iid: (0, 0)),  # resident
            pl.BlockSpec((NI, E_pad), lambda b, uid, iid: (0, 0)),  # resident
            pl.BlockSpec(memory_space=pltpu.MemorySpace.SMEM),      # mean
        ]
        scratch_shapes = [pltpu.VMEM((TB, E_pad), jnp.float32),
                          pltpu.VMEM((TB, E_pad), jnp.float32)]
        # No cross-step dependencies -> batch tiles split across v7x's 2 TCs.
        dim_sem = ("parallel",)
    else:
        kernel = hbm_kernel
        in_specs = [
            pl.BlockSpec(memory_space=pl.ANY),                      # user table
            pl.BlockSpec(memory_space=pl.ANY),                      # item table
            pl.BlockSpec(memory_space=pltpu.MemorySpace.SMEM),      # mean
        ]
        scratch_shapes = [pltpu.VMEM((2, TB, E_pad), jnp.float32),
                          pltpu.VMEM((2, TB, E_pad), jnp.float32),
                          pltpu.SemaphoreType.DMA((2, 2))]
        # Cross-grid-step DMA prefetch requires sequential step order.
        dim_sem = ("arbitrary",)

    grid_spec = pltpu.PrefetchScalarGridSpec(
        num_scalar_prefetch=2,
        grid=(nb,),
        in_specs=in_specs,
        out_specs=out_specs,
        scratch_shapes=scratch_shapes,
    )

    pred2d, u_rows, i_rows = pl.pallas_call(
        kernel,
        out_shape=out_shape,
        grid_spec=grid_spec,
        compiler_params=pltpu.CompilerParams(
            dimension_semantics=dim_sem,
            vmem_limit_bytes=48 * 1024 * 1024),
    )(uid, iid, user_table, item_table, mean2d)

    pred = pred2d[0, :B]
    U = u_rows[:B]
    I = i_rows[:B]
    return pred, U, I


def init_params(key, num_users, num_items, mean, embedding_size):
    k1, k2, k3, k4 = jax.random.split(key, 4)
    user_emb = 0.1 * jax.random.normal(k1, (num_users, embedding_size), jnp.float32)
    user_bias = 0.1 * jax.random.normal(k2, (num_users, 1), jnp.float32)
    item_emb = 0.1 * jax.random.normal(k3, (num_items, embedding_size), jnp.float32)
    item_bias = 0.1 * jax.random.normal(k4, (num_items, 1), jnp.float32)
    mean_p = jnp.asarray([mean], jnp.float32)
    return user_emb, user_bias, item_emb, item_bias, mean_p


def build_tables(user_emb, user_bias, item_emb, item_bias, lane=_LANE):
    """One-time layout prep: fold biases into lane-padded embedding tables."""
    E = user_emb.shape[1]
    E_pad = _round_up(E + 2, lane)
    NU, NI = user_emb.shape[0], item_emb.shape[0]

    utab = jnp.zeros((NU, E_pad), jnp.float32)
    utab = utab.at[:, :E].set(user_emb)
    utab = utab.at[:, E].set(user_bias[:, 0])
    utab = utab.at[:, E + 1].set(1.0)

    itab = jnp.zeros((NI, E_pad), jnp.float32)
    itab = itab.at[:, :E].set(item_emb)
    itab = itab.at[:, E].set(1.0)
    itab = itab.at[:, E + 1].set(item_bias[:, 0])
    return utab, itab


if __name__ == "__main__":
    num_users, num_items = 64, 96
    embedding_size = 32
    mean_rating = 3.5

    key = jax.random.PRNGKey(0)
    kp, ku, ki, ku2, ki2 = jax.random.split(key, 5)
    user_emb, user_bias, item_emb, item_bias, mean_p = init_params(
        kp, num_users, num_items, mean_rating, embedding_size)
    utab, itab = build_tables(user_emb, user_bias, item_emb, item_bias)

    def reference(uu, ii):
        U_ref = user_emb[uu]
        I_ref = item_emb[ii]
        pred_ref = ((U_ref * I_ref).sum(1) + user_bias[uu, 0]
                    + item_bias[ii, 0] + mean_p[0])
        return pred_ref, U_ref, I_ref

    # --- Test 1: small batch -> VMEM-resident-table fast path. ---
    batch = 8
    u_id = jax.random.randint(ku, (batch,), 0, num_users, dtype=jnp.int32)
    i_id = jax.random.randint(ki, (batch,), 0, num_items, dtype=jnp.int32)
    pred, U, I = mf_forward(u_id, i_id, utab, itab, mean_p[0],
                            emb_size=embedding_size)
    jax.block_until_ready((pred, U, I))
    pr, Ur, Ir = reference(u_id, i_id)
    assert pred.shape == (batch,)
    assert U.shape == (batch, embedding_size) and I.shape == (batch, embedding_size)
    assert jnp.allclose(U, Ur, atol=1e-6)
    assert jnp.allclose(I, Ir, atol=1e-6)
    assert jnp.allclose(pred, pr, atol=1e-5)

    # --- Test 2: larger batch, forced HBM row-gather path (2 tiles ->
    #     exercises the cross-grid-step double-buffered prefetch). ---
    batch2 = 640
    u_id2 = jax.random.randint(ku2, (batch2,), 0, num_users, dtype=jnp.int32)
    i_id2 = jax.random.randint(ki2, (batch2,), 0, num_items, dtype=jnp.int32)
    pred2, U2, I2 = mf_forward(u_id2, i_id2, utab, itab, mean_p[0],
                               emb_size=embedding_size, force_hbm_gather=True)
    jax.block_until_ready((pred2, U2, I2))
    pr2, Ur2, Ir2 = reference(u_id2, i_id2)
    assert pred2.shape == (batch2,)
    assert jnp.allclose(U2, Ur2, atol=1e-6)
    assert jnp.allclose(I2, Ir2, atol=1e-6)
    assert jnp.allclose(pred2, pr2, atol=1e-5)

    # TODO(synk): torch's in-forward `print(U)` debug print and the
    # my_gradient_descent helper are not part of the kernel translation.
    print("KERNEL_OK")
</pallas_src>

<mosaic_0001>
module attributes {stable_mosaic.version = 11 : i64} {
  func.func @vmem_kernel(%arg0: i32, %arg1: memref<8xi32, #tpu.memory_space<smem>>, %arg2: memref<8xi32, #tpu.memory_space<smem>>, %arg3: memref<64x128xf32, #tpu.memory_space<vmem>>, %arg4: memref<96x128xf32, #tpu.memory_space<vmem>>, %arg5: memref<1x1xf32, #tpu.memory_space<smem>>, %arg6: memref<1x8xf32, #tpu.memory_space<vmem>>, %arg7: memref<8x32xf32, #tpu.memory_space<vmem>>, %arg8: memref<8x32xf32, #tpu.memory_space<vmem>>, %arg9: memref<8x128xf32, #tpu.memory_space<vmem>>, %arg10: memref<8x128xf32, #tpu.memory_space<vmem>>) attributes {dimension_semantics = [#tpu.dimension_semantics<parallel>], iteration_bounds = array<i64: 1>, scalar_prefetch = 2 : i64, scratch_operands = 2 : i64, tpu.core_type = #tpu.core_type<tc>, window_params = [{pipeline_mode = #tpu.pipeline_mode<synchronous>, transform_indices = @transform_0, window_bounds = array<i64: 64, 128>}, {pipeline_mode = #tpu.pipeline_mode<synchronous>, transform_indices = @transform_1, window_bounds = array<i64: 96, 128>}, {transform_indices = @transform_2, window_bounds = array<i64: 1, 1>}, {transform_indices = @transform_3, window_bounds = array<i64: 1, 8>}, {transform_indices = @transform_4, window_bounds = array<i64: 8, 32>}, {transform_indices = @transform_5, window_bounds = array<i64: 8, 32>}]} {
    %c8_i32 = arith.constant 8 : i32
    %0 = arith.muli %arg0, %c8_i32 : i32
    %c0_i32 = arith.constant 0 : i32
    %c1_i32 = arith.constant 1 : i32
    %1 = arith.muli %c0_i32, %c1_i32 : i32
    %c0_i32_0 = arith.constant 0 : i32
    %2 = arith.addi %c0_i32_0, %1 : i32
    %c8_i32_1 = arith.constant 8 : i32
    %3 = arith.muli %2, %c8_i32_1 : i32
    %c0_i32_2 = arith.constant 0 : i32
    %4 = arith.addi %3, %c0_i32_2 : i32
    %5 = arith.addi %0, %4 : i32
    %6 = arith.index_cast %5 : i32 to index
    %7 = memref.load %arg1[%6] : memref<8xi32, #tpu.memory_space<smem>>
    %8 = arith.index_cast %7 : i32 to index
    %c0 = arith.constant 0 : index
    %9 = vector.load %arg3[%8, %c0] : memref<64x128xf32, #tpu.memory_space<vmem>>, vector<1x128xf32>
    %10 = vector.shape_cast %9 : vector<1x128xf32> to vector<128xf32>
    %11 = arith.index_cast %4 : i32 to index
    %c0_3 = arith.constant 0 : index
    %12 = vector.load %arg9[%11, %c0_3] : memref<8x128xf32, #tpu.memory_space<vmem>>, vector<1x128xf32>
    %13 = vector.shape_cast %12 : vector<1x128xf32> to vector<128xf32>
    %14 = vector.shape_cast %10 : vector<128xf32> to vector<1x128xf32>
    tpu.vector_store %arg9[%11, %c0_3], %14 {strides = array<i32>} : memref<8x128xf32, #tpu.memory_space<vmem>>, vector<1x128xf32>,
    %15 = arith.addi %0, %4 : i32
    %16 = arith.index_cast %15 : i32 to index
    %17 = memref.load %arg2[%16] : memref<8xi32, #tpu.memory_space<smem>>
    %18 = arith.index_cast %17 : i32 to index
    %c0_4 = arith.constant 0 : index
    %19 = vector.load %arg4[%18, %c0_4] : memref<96x128xf32, #tpu.memory_space<vmem>>, vector<1x128xf32>
    %20 = vector.shape_cast %19 : vector<1x128xf32> to vector<128xf32>
    %21 = arith.index_cast %4 : i32 to index
    %c0_5 = arith.constant 0 : index
    %22 = vector.load %arg10[%21, %c0_5] : memref<8x128xf32, #tpu.memory_space<vmem>>, vector<1x128xf32>
    %23 = vector.shape_cast %22 : vector<1x128xf32> to vector<128xf32>
    %24 = vector.shape_cast %20 : vector<128xf32> to vector<1x128xf32>
    tpu.vector_store %arg10[%21, %c0_5], %24 {strides = array<i32>} : memref<8x128xf32, #tpu.memory_space<vmem>>, vector<1x128xf32>,
    %c8_i32_6 = arith.constant 8 : i32
    %25 = arith.muli %2, %c8_i32_6 : i32
    %c1_i32_7 = arith.constant 1 : i32
    %26 = arith.addi %25, %c1_i32_7 : i32
    %27 = arith.addi %0, %26 : i32
    %28 = arith.index_cast %27 : i32 to index
    %29 = memref.load %arg1[%28] : memref<8xi32, #tpu.memory_space<smem>>
    %30 = arith.index_cast %29 : i32 to index
    %c0_8 = arith.constant 0 : index
    %31 = vector.load %arg3[%30, %c0_8] : memref<64x128xf32, #tpu.memory_space<vmem>>, vector<1x128xf32>
    %32 = vector.shape_cast %31 : vector<1x128xf32> to vector<128xf32>
    %33 = arith.index_cast %26 : i32 to index
    %c0_9 = arith.constant 0 : index
    %34 = vector.load %arg9[%33, %c0_9] : memref<8x128xf32, #tpu.memory_space<vmem>>, vector<1x128xf32>
    %35 = vector.shape_cast %34 : vector<1x128xf32> to vector<128xf32>
    %36 = vector.shape_cast %32 : vector<128xf32> to vector<1x128xf32>
    tpu.vector_store %arg9[%33, %c0_9], %36 {strides = array<i32>} : memref<8x128xf32, #tpu.memory_space<vmem>>, vector<1x128xf32>,
    %37 = arith.addi %0, %26 : i32
    %38 = arith.index_cast %37 : i32 to index
    %39 = memref.load %arg2[%38] : memref<8xi32, #tpu.memory_space<smem>>
    %40 = arith.index_cast %39 : i32 to index
    %c0_10 = arith.constant 0 : index
    %41 = vector.load %arg4[%40, %c0_10] : memref<96x128xf32, #tpu.memory_space<vmem>>, vector<1x128xf32>
    %42 = vector.shape_cast %41 : vector<1x128xf32> to vector<128xf32>
    %43 = arith.index_cast %26 : i32 to index
    %c0_11 = arith.constant 0 : index
    %44 = vector.load %arg10[%43, %c0_11] : memref<8x128xf32, #tpu.memory_space<vmem>>, vector<1x128xf32>
    %45 = vector.shape_cast %44 : vector<1x128xf32> to vector<128xf32>
    %46 = vector.shape_cast %42 : vector<128xf32> to vector<1x128xf32>
    tpu.vector_store %arg10[%43, %c0_11], %46 {strides = array<i32>} : memref<8x128xf32, #tpu.memory_space<vmem>>, vector<1x128xf32>,
    %c8_i32_12 = arith.constant 8 : i32
    %47 = arith.muli %2, %c8_i32_12 : i32
    %c2_i32 = arith.constant 2 : i32
    %48 = arith.addi %47, %c2_i32 : i32
    %49 = arith.addi %0, %48 : i32
    %50 = arith.index_cast %49 : i32 to index
    %51 = memref.load %arg1[%50] : memref<8xi32, #tpu.memory_space<smem>>
    %52 = arith.index_cast %51 : i32 to index
    %c0_13 = arith.constant 0 : index
    %53 = vector.load %arg3[%52, %c0_13] : memref<64x128xf32, #tpu.memory_space<vmem>>, vector<1x128xf32>
    %54 = vector.shape_cast %53 : vector<1x128xf32> to vector<128xf32>
    %55 = arith.index_cast %48 : i32 to index
    %c0_14 = arith.constant 0 : index
    %56 = vector.load %arg9[%55, %c0_14] : memref<8x128xf32, #tpu.memory_space<vmem>>, vector<1x128xf32>
    %57 = vector.shape_cast %56 : vector<1x128xf32> to vector<128xf32>
    %58 = vector.shape_cast %54 : vector<128xf32> to vector<1x128xf32>
    tpu.vector_store %arg9[%55, %c0_14], %58 {strides = array<i32>} : memref<8x128xf32, #tpu.memory_space<vmem>>, vector<1x128xf32>,
    %59 = arith.addi %0, %48 : i32
    %60 = arith.index_cast %59 : i32 to index
    %61 = memref.load %arg2[%60] : memref<8xi32, #tpu.memory_space<smem>>
    %62 = arith.index_cast %61 : i32 to index
    %c0_15 = arith.constant 0 : index
    %63 = vector.load %arg4[%62, %c0_15] : memref<96x128xf32, #tpu.memory_space<vmem>>, vector<1x128xf32>
    %64 = vector.shape_cast %63 : vector<1x128xf32> to vector<128xf32>
    %65 = arith.index_cast %48 : i32 to index
    %c0_16 = arith.constant 0 : index
    %66 = vector.load %arg10[%65, %c0_16] : memref<8x128xf32, #tpu.memory_space<vmem>>, vector<1x128xf32>
    %67 = vector.shape_cast %66 : vector<1x128xf32> to vector<128xf32>
    %68 = vector.shape_cast %64 : vector<128xf32> to vector<1x128xf32>
    tpu.vector_store %arg10[%65, %c0_16], %68 {strides = array<i32>} : memref<8x128xf32, #tpu.memory_space<vmem>>, vector<1x128xf32>,
    %c8_i32_17 = arith.constant 8 : i32
    %69 = arith.muli %2, %c8_i32_17 : i32
    %c3_i32 = arith.constant 3 : i32
    %70 = arith.addi %69, %c3_i32 : i32
    %71 = arith.addi %0, %70 : i32
    %72 = arith.index_cast %71 : i32 to index
    %73 = memref.load %arg1[%72] : memref<8xi32, #tpu.memory_space<smem>>
    %74 = arith.index_cast %73 : i32 to index
    %c0_18 = arith.constant 0 : index
    %75 = vector.load %arg3[%74, %c0_18] : memref<64x128xf32, #tpu.memory_space<vmem>>, vector<1x128xf32>
    %76 = vector.shape_cast %75 : vector<1x128xf32> to vector<128xf32>
    %77 = arith.index_cast %70 : i32 to index
    %c0_19 = arith.constant 0 : index
    %78 = vector.load %arg9[%77, %c0_19] : memref<8x128xf32, #tpu.memory_space<vmem>>, vector<1x128xf32>
    %79 = vector.shape_cast %78 : vector<1x128xf32> to vector<128xf32>
    %80 = vector.shape_cast %76 : vector<128xf32> to vector<1x128xf32>
    tpu.vector_store %arg9[%77, %c0_19], %80 {strides = array<i32>} : memref<8x128xf32, #tpu.memory_space<vmem>>, vector<1x128xf32>,
    %81 = arith.addi %0, %70 : i32
    %82 = arith.index_cast %81 : i32 to index
    %83 = memref.load %arg2[%82] : memref<8xi32, #tpu.memory_space<smem>>
    %84 = arith.index_cast %83 : i32 to index
    %c0_20 = arith.constant 0 : index
    %85 = vector.load %arg4[%84, %c0_20] : memref<96x128xf32, #tpu.memory_space<vmem>>, vector<1x128xf32>
    %86 = vector.shape_cast %85 : vector<1x128xf32> to vector<128xf32>
    %87 = arith.index_cast %70 : i32 to index
    %c0_21 = arith.constant 0 : index
    %88 = vector.load %arg10[%87, %c0_21] : memref<8x128xf32, #tpu.memory_space<vmem>>, vector<1x128xf32>
    %89 = vector.shape_cast %88 : vector<1x128xf32> to vector<128xf32>
    %90 = vector.shape_cast %86 : vector<128xf32> to vector<1x128xf32>
    tpu.vector_store %arg10[%87, %c0_21], %90 {strides = array<i32>} : memref<8x128xf32, #tpu.memory_space<vmem>>, vector<1x128xf32>,
    %c8_i32_22 = arith.constant 8 : i32
    %91 = arith.muli %2, %c8_i32_22 : i32
    %c4_i32 = arith.constant 4 : i32
    %92 = arith.addi %91, %c4_i32 : i32
    %93 = arith.addi %0, %92 : i32
    %94 = arith.index_cast %93 : i32 to index
    %95 = memref.load %arg1[%94] : memref<8xi32, #tpu.memory_space<smem>>
    %96 = arith.index_cast %95 : i32 to index
    %c0_23 = arith.constant 0 : index
    %97 = vector.load %arg3[%96, %c0_23] : memref<64x128xf32, #tpu.memory_space<vmem>>, vector<1x128xf32>
    %98 = vector.shape_cast %97 : vector<1x128xf32> to vector<128xf32>
    %99 = arith.index_cast %92 : i32 to index
    %c0_24 = arith.constant 0 : index
    %100 = vector.load %arg9[%99, %c0_24] : memref<8x128xf32, #tpu.memory_space<vmem>>, vector<1x128xf32>
    %101 = vector.shape_cast %100 : vector<1x128xf32> to vector<128xf32>
    %102 = vector.shape_cast %98 : vector<128xf32> to vector<1x128xf32>
    tpu.vector_store %arg9[%99, %c0_24], %102 {strides = array<i32>} : memref<8x128xf32, #tpu.memory_space<vmem>>, vector<1x128xf32>,
    %103 = arith.addi %0, %92 : i32
    %104 = arith.index_cast %103 : i32 to index
    %105 = memref.load %arg2[%104] : memref<8xi32, #tpu.memory_space<smem>>
    %106 = arith.index_cast %105 : i32 to index
    %c0_25 = arith.constant 0 : index
    %107 = vector.load %arg4[%106, %c0_25] : memref<96x128xf32, #tpu.memory_space<vmem>>, vector<1x128xf32>
    %108 = vector.shape_cast %107 : vector<1x128xf32> to vector<128xf32>
    %109 = arith.index_cast %92 : i32 to index
    %c0_26 = arith.constant 0 : index
    %110 = vector.load %arg10[%109, %c0_26] : memref<8x128xf32, #tpu.memory_space<vmem>>, vector<1x128xf32>
    %111 = vector.shape_cast %110 : vector<1x128xf32> to vector<128xf32>
    %112 = vector.shape_cast %108 : vector<128xf32> to vector<1x128xf32>
    tpu.vector_store %arg10[%109, %c0_26], %112 {strides = array<i32>} : memref<8x128xf32, #tpu.memory_space<vmem>>, vector<1x128xf32>,
    %c8_i32_27 = arith.constant 8 : i32
    %113 = arith.muli %2, %c8_i32_27 : i32
    %c5_i32 = arith.constant 5 : i32
    %114 = arith.addi %113, %c5_i32 : i32
    %115 = arith.addi %0, %114 : i32
    %116 = arith.index_cast %115 : i32 to index
    %117 = memref.load %arg1[%116] : memref<8xi32, #tpu.memory_space<smem>>
    %118 = arith.index_cast %117 : i32 to index
    %c0_28 = arith.constant 0 : index
    %119 = vector.load %arg3[%118, %c0_28] : memref<64x128xf32, #tpu.memory_space<vmem>>, vector<1x128xf32>
    %120 = vector.shape_cast %119 : vector<1x128xf32> to vector<128xf32>
    %121 = arith.index_cast %114 : i32 to index
    %c0_29 = arith.constant 0 : index
    %122 = vector.load %arg9[%121, %c0_29] : memref<8x128xf32, #tpu.memory_space<vmem>>, vector<1x128xf32>
    %123 = vector.shape_cast %122 : vector<1x128xf32> to vector<128xf32>
    %124 = vector.shape_cast %120 : vector<128xf32> to vector<1x128xf32>
    tpu.vector_store %arg9[%121, %c0_29], %124 {strides = array<i32>} : memref<8x128xf32, #tpu.memory_space<vmem>>, vector<1x128xf32>,
    %125 = arith.addi %0, %114 : i32
    %126 = arith.index_cast %125 : i32 to index
    %127 = memref.load %arg2[%126] : memref<8xi32, #tpu.memory_space<smem>>
    %128 = arith.index_cast %127 : i32 to index
    %c0_30 = arith.constant 0 : index
    %129 = vector.load %arg4[%128, %c0_30] : memref<96x128xf32, #tpu.memory_space<vmem>>, vector<1x128xf32>
    %130 = vector.shape_cast %129 : vector<1x128xf32> to vector<128xf32>
    %131 = arith.index_cast %114 : i32 to index
    %c0_31 = arith.constant 0 : index
    %132 = vector.load %arg10[%131, %c0_31] : memref<8x128xf32, #tpu.memory_space<vmem>>, vector<1x128xf32>
    %133 = vector.shape_cast %132 : vector<1x128xf32> to vector<128xf32>
    %134 = vector.shape_cast %130 : vector<128xf32> to vector<1x128xf32>
    tpu.vector_store %arg10[%131, %c0_31], %134 {strides = array<i32>} : memref<8x128xf32, #tpu.memory_space<vmem>>, vector<1x128xf32>,
    %c8_i32_32 = arith.constant 8 : i32
    %135 = arith.muli %2, %c8_i32_32 : i32
    %c6_i32 = arith.constant 6 : i32
    %136 = arith.addi %135, %c6_i32 : i32
    %137 = arith.addi %0, %136 : i32
    %138 = arith.index_cast %137 : i32 to index
    %139 = memref.load %arg1[%138] : memref<8xi32, #tpu.memory_space<smem>>
    %140 = arith.index_cast %139 : i32 to index
    %c0_33 = arith.constant 0 : index
    %141 = vector.load %arg3[%140, %c0_33] : memref<64x128xf32, #tpu.memory_space<vmem>>, vector<1x128xf32>
    %142 = vector.shape_cast %141 : vector<1x128xf32> to vector<128xf32>
    %143 = arith.index_cast %136 : i32 to index
    %c0_34 = arith.constant 0 : index
    %144 = vector.load %arg9[%143, %c0_34] : memref<8x128xf32, #tpu.memory_space<vmem>>, vector<1x128xf32>
    %145 = vector.shape_cast %144 : vector<1x128xf32> to vector<128xf32>
    %146 = vector.shape_cast %142 : vector<128xf32> to vector<1x128xf32>
    tpu.vector_store %arg9[%143, %c0_34], %146 {strides = array<i32>} : memref<8x128xf32, #tpu.memory_space<vmem>>, vector<1x128xf32>,
    %147 = arith.addi %0, %136 : i32
    %148 = arith.index_cast %147 : i32 to index
    %149 = memref.load %arg2[%148] : memref<8xi32, #tpu.memory_space<smem>>
    %150 = arith.index_cast %149 : i32 to index
    %c0_35 = arith.constant 0 : index
    %151 = vector.load %arg4[%150, %c0_35] : memref<96x128xf32, #tpu.memory_space<vmem>>, vector<1x128xf32>
    %152 = vector.shape_cast %151 : vector<1x128xf32> to vector<128xf32>
    %153 = arith.index_cast %136 : i32 to index
    %c0_36 = arith.constant 0 : index
    %154 = vector.load %arg10[%153, %c0_36] : memref<8x128xf32, #tpu.memory_space<vmem>>, vector<1x128xf32>
    %155 = vector.shape_cast %154 : vector<1x128xf32> to vector<128xf32>
    %156 = vector.shape_cast %152 : vector<128xf32> to vector<1x128xf32>
    tpu.vector_store %arg10[%153, %c0_36], %156 {strides = array<i32>} : memref<8x128xf32, #tpu.memory_space<vmem>>, vector<1x128xf32>,
    %c8_i32_37 = arith.constant 8 : i32
    %157 = arith.muli %2, %c8_i32_37 : i32
    %c7_i32 = arith.constant 7 : i32
    %158 = arith.addi %157, %c7_i32 : i32
    %159 = arith.addi %0, %158 : i32
    %160 = arith.index_cast %159 : i32 to index
    %161 = memref.load %arg1[%160] : memref<8xi32, #tpu.memory_space<smem>>
    %162 = arith.index_cast %161 : i32 to index
    %c0_38 = arith.constant 0 : index
    %163 = vector.load %arg3[%162, %c0_38] : memref<64x128xf32, #tpu.memory_space<vmem>>, vector<1x128xf32>
    %164 = vector.shape_cast %163 : vector<1x128xf32> to vector<128xf32>
    %165 = arith.index_cast %158 : i32 to index
    %c0_39 = arith.constant 0 : index
    %166 = vector.load %arg9[%165, %c0_39] : memref<8x128xf32, #tpu.memory_space<vmem>>, vector<1x128xf32>
    %167 = vector.shape_cast %166 : vector<1x128xf32> to vector<128xf32>
    %168 = vector.shape_cast %164 : vector<128xf32> to vector<1x128xf32>
    tpu.vector_store %arg9[%165, %c0_39], %168 {strides = array<i32>} : memref<8x128xf32, #tpu.memory_space<vmem>>, vector<1x128xf32>,
    %169 = arith.addi %0, %158 : i32
    %170 = arith.index_cast %169 : i32 to index
    %171 = memref.load %arg2[%170] : memref<8xi32, #tpu.memory_space<smem>>
    %172 = arith.index_cast %171 : i32 to index
    %c0_40 = arith.constant 0 : index
    %173 = vector.load %arg4[%172, %c0_40] : memref<96x128xf32, #tpu.memory_space<vmem>>, vector<1x128xf32>
    %174 = vector.shape_cast %173 : vector<1x128xf32> to vector<128xf32>
    %175 = arith.index_cast %158 : i32 to index
    %c0_41 = arith.constant 0 : index
    %176 = vector.load %arg10[%175, %c0_41] : memref<8x128xf32, #tpu.memory_space<vmem>>, vector<1x128xf32>
    %177 = vector.shape_cast %176 : vector<1x128xf32> to vector<128xf32>
    %178 = vector.shape_cast %174 : vector<128xf32> to vector<1x128xf32>
    tpu.vector_store %arg10[%175, %c0_41], %178 {strides = array<i32>} : memref<8x128xf32, #tpu.memory_space<vmem>>, vector<1x128xf32>,
    %c1_i32_42 = arith.constant 1 : i32
    %c0_43 = arith.constant 0 : index
    %c0_44 = arith.constant 0 : index
    %179 = vector.load %arg9[%c0_43, %c0_44] : memref<8x128xf32, #tpu.memory_space<vmem>>, vector<8x128xf32>
    %c0_45 = arith.constant 0 : index
    %c0_46 = arith.constant 0 : index
    %180 = vector.load %arg10[%c0_45, %c0_46] : memref<8x128xf32, #tpu.memory_space<vmem>>, vector<8x128xf32>
    %181 = vector.extract_strided_slice %179 {offsets = [0, 0], sizes = [8, 32], strides = [1, 1]} : vector<8x128xf32> to vector<8x32xf32>
    %c0_47 = arith.constant 0 : index
    %c0_48 = arith.constant 0 : index
    %182 = vector.load %arg7[%c0_47, %c0_48] : memref<8x32xf32, #tpu.memory_space<vmem>>, vector<8x32xf32>
    tpu.vector_store %arg7[%c0_47, %c0_48], %181 {strides = array<i32>} : memref<8x32xf32, #tpu.memory_space<vmem>>, vector<8x32xf32>,
    %183 = vector.extract_strided_slice %180 {offsets = [0, 0], sizes = [8, 32], strides = [1, 1]} : vector<8x128xf32> to vector<8x32xf32>
    %c0_49 = arith.constant 0 : index
    %c0_50 = arith.constant 0 : index
    %184 = vector.load %arg8[%c0_49, %c0_50] : memref<8x32xf32, #tpu.memory_space<vmem>>, vector<8x32xf32>
    tpu.vector_store %arg8[%c0_49, %c0_50], %183 {strides = array<i32>} : memref<8x32xf32, #tpu.memory_space<vmem>>, vector<8x32xf32>,
    %185 = arith.mulf %179, %180 : vector<8x128xf32>
    %cst = arith.constant 1.000000e+00 : f32
    %186 = vector.broadcast %cst : f32 to vector<1x128xf32>
    %cst_51 = arith.constant dense<0.000000e+00> : vector<1x8xf32>
    %187 = tpu.matmul %186, %185, %cst_51 {dimension_numbers = #tpu.dot_dimension_numbers<[1], [1], [0], [0], [0, 0, 1, 0], [], []>} : vector<1x128xf32>, vector<8x128xf32>, vector<1x8xf32> -> vector<1x8xf32>
    %c0_52 = arith.constant 0 : index
    %c0_53 = arith.constant 0 : index
    %188 = memref.load %arg5[%c0_52, %c0_53] : memref<1x1xf32, #tpu.memory_space<smem>>
    %189 = vector.broadcast %188 : f32 to vector<1x8xf32>
    %190 = arith.addf %187, %189 : vector<1x8xf32>
    %c0_54 = arith.constant 0 : index
    %c0_55 = arith.constant 0 : index
    %191 = vector.load %arg6[%c0_54, %c0_55] : memref<1x8xf32, #tpu.memory_space<vmem>>, vector<1x8xf32>
    tpu.vector_store %arg6[%c0_54, %c0_55], %190 {strides = array<i32>} : memref<1x8xf32, #tpu.memory_space<vmem>>, vector<1x8xf32>,
    return
  }
  func.func @transform_0(%arg0: i32, %arg1: memref<8xi32, #tpu.memory_space<smem>>, %arg2: memref<8xi32, #tpu.memory_space<smem>>) -> (i32, i32) {
    %c0_i32 = arith.constant 0 : i32
    %c0_i32_0 = arith.constant 0 : i32
    %c0_i32_1 = arith.constant 0 : i32
    return %c0_i32, %c0_i32_0 : i32, i32
  }
  func.func @transform_1(%arg0: i32, %arg1: memref<8xi32, #tpu.memory_space<smem>>, %arg2: memref<8xi32, #tpu.memory_space<smem>>) -> (i32, i32) {
    %c0_i32 = arith.constant 0 : i32
    %c0_i32_0 = arith.constant 0 : i32
    %c0_i32_1 = arith.constant 0 : i32
    return %c0_i32, %c0_i32_0 : i32, i32
  }
  func.func @transform_2(%arg0: i32, %arg1: memref<8xi32, #tpu.memory_space<smem>>, %arg2: memref<8xi32, #tpu.memory_space<smem>>) -> (i32, i32) {
    %c0_i32 = arith.constant 0 : i32
    %c0_i32_0 = arith.constant 0 : i32
    %c0_i32_1 = arith.constant 0 : i32
    return %c0_i32, %c0_i32_0 : i32, i32
  }
  func.func @transform_3(%arg0: i32, %arg1: memref<8xi32, #tpu.memory_space<smem>>, %arg2: memref<8xi32, #tpu.memory_space<smem>>) -> (i32, i32) {
    %c0_i32 = arith.constant 0 : i32
    %c0_i32_0 = arith.constant 0 : i32
    return %c0_i32, %arg0 : i32, i32
  }
  func.func @transform_4(%arg0: i32, %arg1: memref<8xi32, #tpu.memory_space<smem>>, %arg2: memref<8xi32, #tpu.memory_space<smem>>) -> (i32, i32) {
    %c0_i32 = arith.constant 0 : i32
    %c0_i32_0 = arith.constant 0 : i32
    return %arg0, %c0_i32 : i32, i32
  }
  func.func @transform_5(%arg0: i32, %arg1: memref<8xi32, #tpu.memory_space<smem>>, %arg2: memref<8xi32, #tpu.memory_space<smem>>) -> (i32, i32) {
    %c0_i32 = arith.constant 0 : i32
    %c0_i32_0 = arith.constant 0 : i32
    return %arg0, %c0_i32 : i32, i32
  }
}

</mosaic_0001>

<llo_original>
// kernel: mf_forward.1
$region0: #{mf_forward.1}
  #allocation0 [shape = 'u32[]', space=smem, size = 0x4, offset = 0x4, fixed_abs, tag = 'smem constant byte address 0x4 - core index']
  #allocation1 [shape = 'u32[144,128]{1,0:T(1,128)}', space=vmem, size = 0x12000, scoped, tag = 'internal scratch']
  #allocation2 [shape = 'f32[8,128]{1,0:T(8,128)}', space=vmem, size = 0x1000, scoped, tag = 'scratch operand']
  #allocation3 [shape = 'f32[8,128]{1,0:T(8,128)}', space=vmem, size = 0x1000, scoped, tag = 'scratch operand']
  #allocation4 [shape = 's32[1]{0}', space=sflag, size = 0x4, scoped, tag = 'scoped memory for mf_forward.1']
  #allocation5 [shape = 'u8[512]{0}', space=smem, size = 0x200, scoped, tag = 'prefetched SMEM operand 0']
  #allocation6 [shape = 'u8[512]{0}', space=smem, size = 0x200, scoped, tag = 'prefetched SMEM operand 1']
  #allocation7 [shape = 'f32[1,1]{1,0:T(1,128)S(6)}', space=smem, size = 0x200, scoped, tag = 'scoped memory for mf_forward.1']
  %s0 = inlined_call_operand.vmem [shape: s32[8], index: 0, kind: input, shape index: {}]
  %s1 = inlined_call_operand.vmem [shape: s32[8], index: 1, kind: input, shape index: {}]
  %s2 = inlined_call_operand.hbm [shape: f32[64,128], index: 2, kind: input, shape index: {}]
  %s3 = inlined_call_operand.hbm [shape: f32[96,128], index: 3, kind: input, shape index: {}]
  %s4 = inlined_call_operand.<no memory space> [shape: f32[1,1], index: 4, kind: input, shape index: {}]
  %s5 = inlined_call_operand.hbm [shape: f32[1,8], index: 5, kind: output, shape index: {0}]
  %s6 = inlined_call_operand.hbm [shape: f32[8,32], index: 6, kind: output, shape index: {1}]
  %s7 = inlined_call_operand.hbm [shape: f32[8,32], index: 7, kind: output, shape index: {2}]
  %8 = xla_tuple %s5, %s6, %s7
  %s9 = sld [smem:[#allocation0]]
  $region46: #{mf_forward.1} parent=0
    _
  %s11 = ssub.s32 1, %s9
  %s12 = scalar_select 0, %s11, %s9
  %s13 = sshll.u32 %s0, 4
  %s14 = int_to_ptr.vmem [resolvable:$true] %s13
  %16 = dma.vmem_to_smem %s14, 16, [#allocation5], [#allocation4]
  %s17 = sshll.u32 %s1, 4
  %s18 = int_to_ptr.vmem [resolvable:$true] %s17
  %20 = dma.vmem_to_smem %s18, 16, [#allocation6], [#allocation4]
  %21 = sst [smem:[#allocation7]] %s4
  %22 = dma.done [#allocation4], 32
  %23 = sfence
  $region1: #{mf_forward.1} parent=0
    #allocation8 [shape = 'u8[32768]{0}', space=vmem, size = 0x8000, scoped, tag = 'input window, operand 2, single buffered']
    #allocation9 [shape = 's32[1]{0}', space=sflag, size = 0x4, scoped, tag = 'scoped memory for mf_forward.1']
    #allocation10 [shape = 's32[1]{0}', space=sflag, size = 0x4, scoped, tag = 'scoped memory for mf_forward.1']
    #allocation11 [shape = 'u8[49152]{0}', space=vmem, size = 0xc000, scoped, tag = 'input window, operand 3, single buffered']
    #allocation12 [shape = 's32[1]{0}', space=sflag, size = 0x4, scoped, tag = 'scoped memory for mf_forward.1']
    #allocation13 [shape = 'u8[512]{0}', space=vmem, size = 0x400, scoped, tag = 'output window, operand 0, single buffered']
    #allocation14 [shape = 'u8[4096]{0}', space=vmem, size = 0x1000, scoped, tag = 'output window, operand 1, single buffered']
    #allocation15 [shape = 's32[1]{0}', space=sflag, size = 0x4, scoped, tag = 'scoped memory for mf_forward.1']
    #allocation16 [shape = 'u8[4096]{0}', space=vmem, size = 0x1000, scoped, tag = 'output window, operand 2, single buffered']
    %24 = vsyncpa [#allocation9], 0
    %25 = vsyncpa [#allocation12], 0
    %26 = vsyncpa [#allocation10], 0
    %27 = vsyncpa [#allocation15], 0
    // Predicated region
    $region2: #{mf_forward.1} parent=1 // pred_check
      _
    $region3: #{mf_forward.1} parent=1 // pred_check_branch
      %29 = sbr.rel (0) target = $region5
    $region4: #{mf_forward.1} parent=1 // pred_region
      %s31 = ssub.s32 1024, 1024
      %32 = vsyncadd [#allocation9], %s31
      %s33 = sshll.u32 [#allocation8], 4
      %s34 = int_to_ptr.vmem [resolvable:$true] %s33
      %39 = dma.hbm_to_vmem [thread:$0]  %s2, 1024, %s34, [#allocation9], 128, 128, 8
    $region5: #{mf_forward.1} parent=1 // pred_fallthru
      _
    // Predicated region
    $region6: #{mf_forward.1} parent=1 // pred_check
      _
    $region7: #{mf_forward.1} parent=1 // pred_check_branch
      %41 = sbr.rel (0) target = $region9
    $region8: #{mf_forward.1} parent=1 // pred_region
      %s43 = ssub.s32 1536, 1536
      %44 = vsyncadd [#allocation12], %s43
      %s45 = sshll.u32 [#allocation11], 4
      %s46 = int_to_ptr.vmem [resolvable:$true] %s45
      %51 = dma.hbm_to_vmem [thread:$0]  %s3, 1536, %s46, [#allocation12], 128, 128, 8
    $region9: #{mf_forward.1} parent=1 // pred_fallthru
      _
    // Predicated region
    $region10: #{mf_forward.1} parent=1 // pred_check
      _
    $region11: #{mf_forward.1} parent=1 // pred_check_branch
      %53 = sbr.rel (0) target = $region13
    $region12: #{mf_forward.1} parent=1 // pred_region
      _
    $region13: #{mf_forward.1} parent=1 // pred_fallthru
      _
    // Predicated region
    $region14: #{mf_forward.1} parent=1 // pred_check
      _
    $region15: #{mf_forward.1} parent=1 // pred_check_branch
      %55 = sbr.rel (0) target = $region17
    $region16: #{mf_forward.1} parent=1 // pred_region
      %56 = dma.done [#allocation9], 1024
    $region17: #{mf_forward.1} parent=1 // pred_fallthru
      _
    // Predicated region
    $region18: #{mf_forward.1} parent=1 // pred_check
      _
    $region19: #{mf_forward.1} parent=1 // pred_check_branch
      %58 = sbr.rel (0) target = $region21
    $region20: #{mf_forward.1} parent=1 // pred_region
      %59 = dma.done [#allocation12], 1536
    $region21: #{mf_forward.1} parent=1 // pred_fallthru
      _
    %s60 = smul.u32 0, 8
    %s61 = sld [smem:[#allocation5 + %s60]]
    %s62 = scalar_lea.vmem [#allocation8], %s61
    %v63 = vld [vmem:[%s62] sm:$0x1]
    %64 = vst [vmem:[#allocation2] sm:$0x1] %v63
    %s65 = sld [smem:[#allocation6 + %s60]]
    %s66 = scalar_lea.vmem [#allocation11], %s65
    %v67 = vld [vmem:[%s66] sm:$0x1]
    %68 = vst [vmem:[#allocation3] sm:$0x1] %v67
    %s69 = sadd.s32 %s60, 1
    %s70 = sld [smem:[#allocation5 + %s69]]
    %s71 = scalar_lea.vmem [#allocation8], %s70
    %v72 = vld [vmem:[%s71] sm:$0x1]
    %73 = vst [vmem:[#allocation2 + $0x1] sm:$0x1] %v72
    %s74 = sld [smem:[#allocation6 + %s69]]
    %s75 = scalar_lea.vmem [#allocation11], %s74
    %v76 = vld [vmem:[%s75] sm:$0x1]
    %77 = vst [vmem:[#allocation3 + $0x1] sm:$0x1] %v76
    %s78 = sadd.s32 %s60, 2
    %s79 = sld [smem:[#allocation5 + %s78]]
    %s80 = scalar_lea.vmem [#allocation8], %s79
    %v81 = vld [vmem:[%s80] sm:$0x1]
    %82 = vst [vmem:[#allocation2 + $0x2] sm:$0x1] %v81
    %s83 = sld [smem:[#allocation6 + %s78]]
    %s84 = scalar_lea.vmem [#allocation11], %s83
    %v85 = vld [vmem:[%s84] sm:$0x1]
    %86 = vst [vmem:[#allocation3 + $0x2] sm:$0x1] %v85
    %s87 = sadd.s32 %s60, 3
    %s88 = sld [smem:[#allocation5 + %s87]]
    %s89 = scalar_lea.vmem [#allocation8], %s88
    %v90 = vld [vmem:[%s89] sm:$0x1]
    %91 = vst [vmem:[#allocation2 + $0x3] sm:$0x1] %v90
    %s92 = sld [smem:[#allocation6 + %s87]]
    %s93 = scalar_lea.vmem [#allocation11], %s92
    %v94 = vld [vmem:[%s93] sm:$0x1]
    %95 = vst [vmem:[#allocation3 + $0x3] sm:$0x1] %v94
    %s96 = sadd.s32 %s60, 4
    %s97 = sld [smem:[#allocation5 + %s96]]
    %s98 = scalar_lea.vmem [#allocation8], %s97
    %v99 = vld [vmem:[%s98] sm:$0x1]
    %100 = vst [vmem:[#allocation2 + $0x4] sm:$0x1] %v99
    %s101 = sld [smem:[#allocation6 + %s96]]
    %s102 = scalar_lea.vmem [#allocation11], %s101
    %v103 = vld [vmem:[%s102] sm:$0x1]
    %104 = vst [vmem:[#allocation3 + $0x4] sm:$0x1] %v103
    %s105 = sadd.s32 %s60, 5
    %s106 = sld [smem:[#allocation5 + %s105]]
    %s107 = scalar_lea.vmem [#allocation8], %s106
    %v108 = vld [vmem:[%s107] sm:$0x1]
    %109 = vst [vmem:[#allocation2 + $0x5] sm:$0x1] %v108
    %s110 = sld [smem:[#allocation6 + %s105]]
    %s111 = scalar_lea.vmem [#allocation11], %s110
    %v112 = vld [vmem:[%s111] sm:$0x1]
    %113 = vst [vmem:[#allocation3 + $0x5] sm:$0x1] %v112
    %s114 = sadd.s32 %s60, 6
    %s115 = sld [smem:[#allocation5 + %s114]]
    %s116 = scalar_lea.vmem [#allocation8], %s115
    %v117 = vld [vmem:[%s116] sm:$0x1]
    %118 = vst [vmem:[#allocation2 + $0x6] sm:$0x1] %v117
    %s119 = sld [smem:[#allocation6 + %s114]]
    %s120 = scalar_lea.vmem [#allocation11], %s119
    %v121 = vld [vmem:[%s120] sm:$0x1]
    %122 = vst [vmem:[#allocation3 + $0x6] sm:$0x1] %v121
    %s123 = sadd.s32 %s60, 7
    %s124 = sld [smem:[#allocation5 + %s123]]
    %s125 = scalar_lea.vmem [#allocation8], %s124
    %v126 = vld [vmem:[%s125] sm:$0x1]
    %127 = vst [vmem:[#allocation2 + $0x7] sm:$0x1] %v126
    %s128 = sld [smem:[#allocation6 + %s123]]
    %s129 = scalar_lea.vmem [#allocation11], %s128
    %v130 = vld [vmem:[%s129] sm:$0x1]
    %131 = vst [vmem:[#allocation3 + $0x7] sm:$0x1] %v130
    %v132 = vld [vmem:[#allocation2] sm:$0xff]
    %v133 = vld [vmem:[#allocation3] sm:$0xff]
    %vm134 = vcmask 261120
    %135 = vst.msk [vmem:[#allocation14] sm:$0xff] %vm134, %v132
    %136 = vst.msk [vmem:[#allocation16] sm:$0xff] %vm134, %v133
    %v137 = vmul.f32 %v132, %v133
    %s138 = sld [smem:[#allocation7]]
    %v139 = vstv %s138
    %140 = vmatprep.subr.mxu0 0.0
    %141 = vmatpush1.xpose.msra.mxu0 0.0
    %142 = vmatprep.subr.mxu0 0.0
    %143 = vmatpush1.xpose.msra.mxu0 0.0
    %144 = vmatprep.subr.mxu0 0.0
    %145 = vmatpush1.xpose.msra.mxu0 0.0
    %146 = vmatprep.subr.mxu0 0.0
    %147 = vmatpush1.xpose.msra.mxu0 0.0
    %148 = vmatprep.subr.mxu0 0.0
    %149 = vmatpush1.xpose.msra.mxu0 0.0
    %150 = vmatprep.subr.mxu0 0.0
    %151 = vmatpush1.xpose.msra.mxu0 0.0
    %152 = vmatprep.subr.mxu0 0.0
    %153 = vmatpush1.xpose.msra.mxu0 0.0
    %154 = vmatprep.subr.mxu0 0.0
    %155 = vmatpush1.xpose.msra.mxu0 0.0
    %156 = vmatprep.subr.mxu0 0.0
    %157 = vmatpush1.xpose.msra.mxu0 0.0
    %158 = vmatprep.subr.mxu0 0.0
    %159 = vmatpush1.xpose.msra.mxu0 0.0
    %160 = vmatprep.subr.mxu0 0.0
    %161 = vmatpush1.xpose.msra.mxu0 0.0
    %162 = vmatprep.subr.mxu0 0.0
    %163 = vmatpush1.xpose.msra.mxu0 0.0
    %164 = vmatprep.subr.mxu0 0.0
    %165 = vmatpush1.xpose.msra.mxu0 0.0
    %166 = vmatprep.subr.mxu0 0.0
    %167 = vmatpush1.xpose.msra.mxu0 0.0
    %168 = vmatprep.subr.mxu0 0.0
    %169 = vmatpush1.xpose.msra.mxu0 0.0
    %170 = vmatprep.subr.mxu0 0.0
    %171 = vmatpush1.xpose.msra.mxu0 %v137
    %172 = vmatprep.subr.mxu0 0.0
    %173 = vmatpush2.xpose.msra.mxu0 0.0
    %174 = vmatprep.subr.mxu0 0.0
    %175 = vmatpush2.xpose.msra.mxu0 0.0
    %176 = vmatprep.subr.mxu0 0.0
    %177 = vmatpush2.xpose.msra.mxu0 0.0
    %178 = vmatprep.subr.mxu0 0.0
    %179 = vmatpush2.xpose.msra.mxu0 0.0
    %180 = vmatprep.subr.mxu0 0.0
    %181 = vmatpush2.xpose.msra.mxu0 0.0
    %182 = vmatprep.subr.mxu0 0.0
    %183 = vmatpush2.xpose.msra.mxu0 0.0
    %184 = vmatprep.subr.mxu0 0.0
    %185 = vmatpush2.xpose.msra.mxu0 0.0
    %186 = vmatprep.subr.mxu0 0.0
    %187 = vmatpush2.xpose.msra.mxu0 0.0
    %188 = vmatprep.subr.mxu0 0.0
    %189 = vmatpush2.xpose.msra.mxu0 0.0
    %190 = vmatprep.subr.mxu0 0.0
    %191 = vmatpush2.xpose.msra.mxu0 0.0
    %192 = vmatprep.subr.mxu0 0.0
    %193 = vmatpush2.xpose.msra.mxu0 0.0
    %194 = vmatprep.subr.mxu0 0.0
    %195 = vmatpush2.xpose.msra.mxu0 0.0
    %196 = vmatprep.subr.mxu0 0.0
    %197 = vmatpush2.xpose.msra.mxu0 0.0
    %198 = vmatprep.subr.mxu0 0.0
    %199 = vmatpush2.xpose.msra.mxu0 0.0
    %200 = vmatprep.subr.mxu0 0.0
    %201 = vmatpush2.xpose.msra.mxu0 0.0
    %202 = vmatprep.subr.mxu0 0.0
    %203 = vmatpush2.xpose.msra.mxu0 0.0
    %204 = vmatprep.mubr.f32.mxu0 0.0
    %205 = vmatmul.mubr.f32.gmra.mxu0 1.0
    %v206 = vpop.f32.mrf.mxu0
    %v207 = vadd.f32 %v139, %v206
    %v208 = vpop.f32.mrf.mxu0
    %209 = vdwg.mxu0
    %vm210 = vcmask 57344
    %211 = vst.msk [vmem:[#allocation13] sm:$0x1] %vm210, %v207
    // Predicated region
    $region22: #{mf_forward.1} parent=1 // pred_check
      _
    $region23: #{mf_forward.1} parent=1 // pred_check_branch
      %213 = sbr.rel (0) target = $region25
    $region24: #{mf_forward.1} parent=1 // pred_region
      %s215 = ssub.s32 16, 16
      %216 = vsyncadd [#allocation10], %s215
      %s218 = sshll.u32 [#allocation13], 4
      %s219 = int_to_ptr.vmem [resolvable:$true] %s218
      %221 = dma.vmem_to_hbm [thread:$0]  %s219, 16, %s5, [#allocation10]
    $region25: #{mf_forward.1} parent=1 // pred_fallthru
      _
    // Predicated region
    $region26: #{mf_forward.1} parent=1 // pred_check
      _
    $region27: #{mf_forward.1} parent=1 // pred_check_branch
      %223 = sbr.rel (0) target = $region29
    $region28: #{mf_forward.1} parent=1 // pred_region
      %s225 = ssub.s32 128, 128
      %226 = vsyncadd [#allocation15], %s225
      %s228 = sshll.u32 [#allocation14], 4
      %s229 = int_to_ptr.vmem [resolvable:$true] %s228
      %231 = dma.vmem_to_hbm [thread:$0]  %s229, 128, %s6, [#allocation15]
    $region29: #{mf_forward.1} parent=1 // pred_fallthru
      _
    // Predicated region
    $region30: #{mf_forward.1} parent=1 // pred_check
      _
    $region31: #{mf_forward.1} parent=1 // pred_check_branch
      %233 = sbr.rel (0) target = $region33
    $region32: #{mf_forward.1} parent=1 // pred_region
      %s235 = ssub.s32 128, 128
      %236 = vsyncadd [#allocation15], %s235
      %s238 = sshll.u32 [#allocation16], 4
      %s239 = int_to_ptr.vmem [resolvable:$true] %s238
      %241 = dma.vmem_to_hbm [thread:$0]  %s239, 128, %s7, [#allocation15]
    $region33: #{mf_forward.1} parent=1 // pred_fallthru
      _
    // Predicated region
    $region34: #{mf_forward.1} parent=1 // pred_check
      _
    $region35: #{mf_forward.1} parent=1 // pred_check_branch
      %243 = sbr.rel (0) target = $region37
    $region36: #{mf_forward.1} parent=1 // pred_region
      %244 = dma.done [#allocation10], 16
    $region37: #{mf_forward.1} parent=1 // pred_fallthru
      _
    // Predicated region
    $region38: #{mf_forward.1} parent=1 // pred_check
      _
    $region39: #{mf_forward.1} parent=1 // pred_check_branch
      %246 = sbr.rel (0) target = $region41
    $region40: #{mf_forward.1} parent=1 // pred_region
      %247 = dma.done [#allocation15], 128
    $region41: #{mf_forward.1} parent=1 // pred_fallthru
      _
    // Predicated region
    $region42: #{mf_forward.1} parent=1 // pred_check
      _
    $region43: #{mf_forward.1} parent=1 // pred_check_branch
      %249 = sbr.rel (0) target = $region45
    $region44: #{mf_forward.1} parent=1 // pred_region
      %250 = dma.done [#allocation15], 128
    $region45: #{mf_forward.1} parent=1 // pred_fallthru
      _
    %251 = vsyncpa [#allocation9], 1
    %252 = vsyncpa [#allocation12], 1
    %253 = vsyncpa [#allocation10], 1
    %254 = vsyncpa [#allocation15], 1

</llo_original>
